<compile_context>
chip_gen: v7x
topology: tpu7x:2x2x1
jax: 0.10.0
libtpu: 0.0.40
codegen_flags: <defaults>
</compile_context>

<pallas_src>
import jax
import jax.numpy as jnp
from jax.experimental import pallas as pl
from jax.experimental.pallas import tpu as pltpu


def _round_up(x, m):
    return (x + m - 1) // m * m


# ----------------------------------------------------------------------------
# Pallas kernels
# ----------------------------------------------------------------------------
def _conv_kernel(t_ref, w_ref, b_ref, o_ref):
    # t_ref: (3*C_in, TL)   taps tile (length on the 128-lane axis)
    # w_ref: (C_out, 3*C_in) packed conv weight
    # b_ref: (C_out, 1)      bias
    # o_ref: (C_out, TL)     lane-dense output tile
    k_dim, tl = t_ref.shape
    c_out = o_ref.shape[0]

    t = t_ref[...].astype(jnp.float32)
    w = w_ref[...].astype(jnp.float32)
    b = b_ref[...].astype(jnp.float32)

    if k_dim <= 32:
        # Tiny channel count: a K=3*C_in matmul would waste >95% of the MXU,
        # so do the contraction as unrolled VPU multiply-accumulates instead.
        acc = jnp.broadcast_to(b, (c_out, tl))
        for r in range(k_dim):
            acc = acc + w[:, r:r + 1] * t[r:r + 1, :]
    else:
        acc = jnp.dot(w, t, preferred_element_type=jnp.float32) + b

    o_ref[...] = acc.astype(o_ref.dtype)


def _avgpool_kernel(x_ref, o_ref):
    # x_ref: (TM, 2*TL) interleaved pairs; o_ref: (TM, TL)
    tl = o_ref.shape[-1]
    even = x_ref[:, pl.ds(0, tl, stride=2)].astype(jnp.float32)
    odd = x_ref[:, pl.ds(1, tl, stride=2)].astype(jnp.float32)
    o_ref[...] = ((even + odd) * 0.5).astype(o_ref.dtype)


# ----------------------------------------------------------------------------
# Wrappers
# ----------------------------------------------------------------------------
def downsample1d_conv(x, weight, bias, *, l_tile=512):
    """Conv1d(C, C, kernel_size=3, stride=2, padding=0) applied to F.pad(x,(1,1)).

    x:      (N, C_in, L)       -- PyTorch NCL layout
    weight: (C_out, C_in, 3)
    bias:   (C_out,)
    returns (N, C_out, L_out) with L_out = (L - 1) // 2 + 1
    """
    N, C_in, L = x.shape
    C_out = weight.shape[0]
    L_out = (L - 1) // 2 + 1

    # Length tiling: full extent for small L_out, else 512-wide lane-dense tiles.
    if L_out <= l_tile:
        TL, L_out_p = L_out, L_out
    else:
        TL = l_tile
        L_out_p = _round_up(L_out, TL)
    gl = L_out_p // TL

    # Zero-pad: 1 on the left (== F.pad(x, (1,1))), enough on the right to cover
    # the (possibly tile-padded) output length. Extra output columns are sliced
    # off at the end, so the padding value never leaks into the result.
    needed = 2 * L_out_p + 2
    x_pad = jnp.pad(x, ((0, 0), (0, 0), (1, needed - (L + 1))))

    # "im2col" without transposes: 3 strided taps stacked along the channel
    # axis, keeping NCL so the output needs no final transpose and L stays on
    # the lane axis. taps row index = c_in*3 + k  (matches weight.reshape below).
    taps = jnp.stack(
        [x_pad[:, :, k:k + 2 * L_out_p:2] for k in range(3)], axis=2
    ).reshape(N, C_in * 3, L_out_p)

    w_mat = weight.reshape(C_out, C_in * 3)
    b_mat = bias.reshape(C_out, 1)

    itemsize = jnp.dtype(x.dtype).itemsize
    cost = pl.CostEstimate(
        flops=2 * N * L_out_p * (C_in * 3) * C_out,
        transcendentals=0,
        bytes_accessed=(taps.size * itemsize
                        + w_mat.size * jnp.dtype(w_mat.dtype).itemsize
                        + N * C_out * L_out_p * itemsize),
    )

    out = pl.pallas_call(
        _conv_kernel,
        out_shape=jax.ShapeDtypeStruct((N, C_out, L_out_p), x.dtype),
        grid=(N, gl),
        in_specs=[
            pl.BlockSpec((None, C_in * 3, TL), lambda n, j: (n, 0, j)),
            pl.BlockSpec((C_out, C_in * 3), lambda n, j: (0, 0)),
            pl.BlockSpec((C_out, 1), lambda n, j: (0, 0)),
        ],
        out_specs=pl.BlockSpec((None, C_out, TL), lambda n, j: (n, 0, j)),
        compiler_params=pltpu.CompilerParams(
            dimension_semantics=("parallel", "parallel"),
            vmem_limit_bytes=48 * 1024 * 1024,
        ),
        cost_estimate=cost,
    )(taps, w_mat, b_mat)

    return out[:, :, :L_out]


def downsample1d_avgpool(x, *, row_tile=512, col_tile=512):
    """AvgPool1d(kernel_size=2, stride=2). x: (N, C, L) -> (N, C, L//2)."""
    N, C, L = x.shape
    L_out = L // 2
    M = N * C
    # Contiguous view: rows = N*C, columns = interleaved pairs. Even/odd split
    # happens inside the kernel, so x is read from HBM exactly once.
    xf = x[:, :, :2 * L_out].reshape(M, 2 * L_out)

    if M <= row_tile:
        TM, Mp = M, M
    else:
        TM = row_tile
        Mp = _round_up(M, TM)
    if L_out <= col_tile:
        TL, Lp = L_out, L_out
    else:
        TL = col_tile
        Lp = _round_up(L_out, TL)

    xf = jnp.pad(xf, ((0, Mp - M), (0, 2 * (Lp - L_out))))

    out = pl.pallas_call(
        _avgpool_kernel,
        out_shape=jax.ShapeDtypeStruct((Mp, Lp), x.dtype),
        grid=(Mp // TM, Lp // TL),
        in_specs=[pl.BlockSpec((TM, 2 * TL), lambda i, j: (i, j))],
        out_specs=pl.BlockSpec((TM, TL), lambda i, j: (i, j)),
        compiler_params=pltpu.CompilerParams(
            dimension_semantics=("parallel", "parallel")),
    )(xf)

    return out[:M, :L_out].reshape(N, C, L_out)


def downsample1d(x, weight=None, bias=None, with_conv=True):
    if with_conv:
        return downsample1d_conv(x, weight, bias)
    return downsample1d_avgpool(x)


# ----------------------------------------------------------------------------
# Reference (pure JAX) for verification
# ----------------------------------------------------------------------------
def _ref_conv(x, weight, bias):
    x_pad = jnp.pad(x, ((0, 0), (0, 0), (1, 1)))
    out = jax.lax.conv_general_dilated(
        x_pad, weight,
        window_strides=(2,), padding="VALID",
        dimension_numbers=("NCH", "OIH", "NCH"),
    )
    return out + bias[None, :, None]


def _ref_avgpool(x):
    N, C, L = x.shape
    L_out = L // 2
    return x[:, :, :2 * L_out].reshape(N, C, L_out, 2).mean(axis=-1)


# ----------------------------------------------------------------------------
if __name__ == "__main__":
    key = jax.random.PRNGKey(0)
    k_x, k_w, k_b = jax.random.split(key, 3)

    N, C, L = 2, 4, 16
    x = jax.random.normal(k_x, (N, C, L), dtype=jnp.float32)

    # deterministic Conv1d(in=C, out=C, kernel_size=3) parameters
    weight = jax.random.normal(k_w, (C, C, 3), dtype=jnp.float32) * 0.1
    bias = jax.random.normal(k_b, (C,), dtype=jnp.float32) * 0.1

    # with_conv = True branch
    out_conv = jax.block_until_ready(downsample1d(x, weight, bias, with_conv=True))
    ref_conv = _ref_conv(x, weight, bias)
    assert out_conv.shape == (N, C, (L - 1) // 2 + 1), out_conv.shape
    assert jnp.allclose(out_conv, ref_conv, atol=1e-5, rtol=1e-5)

    # with_conv = False branch
    out_pool = jax.block_until_ready(downsample1d(x, with_conv=False))
    ref_pool = _ref_avgpool(x)
    assert out_pool.shape == (N, C, L // 2), out_pool.shape
    assert jnp.allclose(out_pool, ref_pool, atol=1e-6, rtol=1e-6)

    print("KERNEL_OK")
</pallas_src>

<mosaic_0001>
module attributes {stable_mosaic.version = 11 : i64} {
  func.func @_conv_kernel(%arg0: i32, %arg1: i32, %arg2: memref<1x12x8xf32, #tpu.memory_space<vmem>>, %arg3: memref<4x12xf32, #tpu.memory_space<vmem>>, %arg4: memref<4x1xf32, #tpu.memory_space<vmem>>, %arg5: memref<1x4x8xf32, #tpu.memory_space<vmem>>) attributes {dimension_semantics = [#tpu.dimension_semantics<parallel>, #tpu.dimension_semantics<parallel>], iteration_bounds = array<i64: 2, 1>, scalar_prefetch = 0 : i64, scratch_operands = 0 : i64, tpu.core_type = #tpu.core_type<tc>, window_params = [{transform_indices = @transform_0, window_bounds = array<i64: 1, 12, 8>}, {pipeline_mode = #tpu.pipeline_mode<synchronous>, transform_indices = @transform_1, window_bounds = array<i64: 4, 12>}, {pipeline_mode = #tpu.pipeline_mode<synchronous>, transform_indices = @transform_2, window_bounds = array<i64: 4, 1>}, {transform_indices = @transform_3, window_bounds = array<i64: 1, 4, 8>}]} {
    %c0 = arith.constant 0 : index
    %c0_0 = arith.constant 0 : index
    %c0_1 = arith.constant 0 : index
    %0 = vector.load %arg2[%c0, %c0_0, %c0_1] : memref<1x12x8xf32, #tpu.memory_space<vmem>>, vector<1x12x8xf32>
    %1 = vector.shape_cast %0 : vector<1x12x8xf32> to vector<12x8xf32>
    %c0_2 = arith.constant 0 : index
    %c0_3 = arith.constant 0 : index
    %2 = vector.load %arg3[%c0_2, %c0_3] : memref<4x12xf32, #tpu.memory_space<vmem>>, vector<4x12xf32>
    %c0_4 = arith.constant 0 : index
    %c0_5 = arith.constant 0 : index
    %3 = vector.load %arg4[%c0_4, %c0_5] : memref<4x1xf32, #tpu.memory_space<vmem>>, vector<4x1xf32>
    %4 = vector.shape_cast %3 : vector<4x1xf32> to vector<4x1xf32>
    %5 = vector.broadcast %4 : vector<4x1xf32> to vector<4x8xf32>
    %6 = vector.extract_strided_slice %2 {offsets = [0, 0], sizes = [4, 1], strides = [1, 1]} : vector<4x12xf32> to vector<4x1xf32>
    %7 = vector.extract_strided_slice %1 {offsets = [0, 0], sizes = [1, 8], strides = [1, 1]} : vector<12x8xf32> to vector<1x8xf32>
    %8 = vector.broadcast %6 : vector<4x1xf32> to vector<4x8xf32>
    %9 = vector.broadcast %7 : vector<1x8xf32> to vector<4x8xf32>
    %10 = arith.mulf %8, %9 : vector<4x8xf32>
    %11 = arith.addf %5, %10 : vector<4x8xf32>
    %12 = vector.extract_strided_slice %2 {offsets = [0, 1], sizes = [4, 1], strides = [1, 1]} : vector<4x12xf32> to vector<4x1xf32>
    %13 = vector.extract_strided_slice %1 {offsets = [1, 0], sizes = [1, 8], strides = [1, 1]} : vector<12x8xf32> to vector<1x8xf32>
    %14 = vector.broadcast %12 : vector<4x1xf32> to vector<4x8xf32>
    %15 = vector.broadcast %13 : vector<1x8xf32> to vector<4x8xf32>
    %16 = arith.mulf %14, %15 : vector<4x8xf32>
    %17 = arith.addf %11, %16 : vector<4x8xf32>
    %18 = vector.extract_strided_slice %2 {offsets = [0, 2], sizes = [4, 1], strides = [1, 1]} : vector<4x12xf32> to vector<4x1xf32>
    %19 = vector.extract_strided_slice %1 {offsets = [2, 0], sizes = [1, 8], strides = [1, 1]} : vector<12x8xf32> to vector<1x8xf32>
    %20 = vector.broadcast %18 : vector<4x1xf32> to vector<4x8xf32>
    %21 = vector.broadcast %19 : vector<1x8xf32> to vector<4x8xf32>
    %22 = arith.mulf %20, %21 : vector<4x8xf32>
    %23 = arith.addf %17, %22 : vector<4x8xf32>
    %24 = vector.extract_strided_slice %2 {offsets = [0, 3], sizes = [4, 1], strides = [1, 1]} : vector<4x12xf32> to vector<4x1xf32>
    %25 = vector.extract_strided_slice %1 {offsets = [3, 0], sizes = [1, 8], strides = [1, 1]} : vector<12x8xf32> to vector<1x8xf32>
    %26 = vector.broadcast %24 : vector<4x1xf32> to vector<4x8xf32>
    %27 = vector.broadcast %25 : vector<1x8xf32> to vector<4x8xf32>
    %28 = arith.mulf %26, %27 : vector<4x8xf32>
    %29 = arith.addf %23, %28 : vector<4x8xf32>
    %30 = vector.extract_strided_slice %2 {offsets = [0, 4], sizes = [4, 1], strides = [1, 1]} : vector<4x12xf32> to vector<4x1xf32>
    %31 = vector.extract_strided_slice %1 {offsets = [4, 0], sizes = [1, 8], strides = [1, 1]} : vector<12x8xf32> to vector<1x8xf32>
    %32 = vector.broadcast %30 : vector<4x1xf32> to vector<4x8xf32>
    %33 = vector.broadcast %31 : vector<1x8xf32> to vector<4x8xf32>
    %34 = arith.mulf %32, %33 : vector<4x8xf32>
    %35 = arith.addf %29, %34 : vector<4x8xf32>
    %36 = vector.extract_strided_slice %2 {offsets = [0, 5], sizes = [4, 1], strides = [1, 1]} : vector<4x12xf32> to vector<4x1xf32>
    %37 = vector.extract_strided_slice %1 {offsets = [5, 0], sizes = [1, 8], strides = [1, 1]} : vector<12x8xf32> to vector<1x8xf32>
    %38 = vector.broadcast %36 : vector<4x1xf32> to vector<4x8xf32>
    %39 = vector.broadcast %37 : vector<1x8xf32> to vector<4x8xf32>
    %40 = arith.mulf %38, %39 : vector<4x8xf32>
    %41 = arith.addf %35, %40 : vector<4x8xf32>
    %42 = vector.extract_strided_slice %2 {offsets = [0, 6], sizes = [4, 1], strides = [1, 1]} : vector<4x12xf32> to vector<4x1xf32>
    %43 = vector.extract_strided_slice %1 {offsets = [6, 0], sizes = [1, 8], strides = [1, 1]} : vector<12x8xf32> to vector<1x8xf32>
    %44 = vector.broadcast %42 : vector<4x1xf32> to vector<4x8xf32>
    %45 = vector.broadcast %43 : vector<1x8xf32> to vector<4x8xf32>
    %46 = arith.mulf %44, %45 : vector<4x8xf32>
    %47 = arith.addf %41, %46 : vector<4x8xf32>
    %48 = vector.extract_strided_slice %2 {offsets = [0, 7], sizes = [4, 1], strides = [1, 1]} : vector<4x12xf32> to vector<4x1xf32>
    %49 = vector.extract_strided_slice %1 {offsets = [7, 0], sizes = [1, 8], strides = [1, 1]} : vector<12x8xf32> to vector<1x8xf32>
    %50 = vector.broadcast %48 : vector<4x1xf32> to vector<4x8xf32>
    %51 = vector.broadcast %49 : vector<1x8xf32> to vector<4x8xf32>
    %52 = arith.mulf %50, %51 : vector<4x8xf32>
    %53 = arith.addf %47, %52 : vector<4x8xf32>
    %54 = vector.extract_strided_slice %2 {offsets = [0, 8], sizes = [4, 1], strides = [1, 1]} : vector<4x12xf32> to vector<4x1xf32>
    %55 = vector.extract_strided_slice %1 {offsets = [8, 0], sizes = [1, 8], strides = [1, 1]} : vector<12x8xf32> to vector<1x8xf32>
    %56 = vector.broadcast %54 : vector<4x1xf32> to vector<4x8xf32>
    %57 = vector.broadcast %55 : vector<1x8xf32> to vector<4x8xf32>
    %58 = arith.mulf %56, %57 : vector<4x8xf32>
    %59 = arith.addf %53, %58 : vector<4x8xf32>
    %60 = vector.extract_strided_slice %2 {offsets = [0, 9], sizes = [4, 1], strides = [1, 1]} : vector<4x12xf32> to vector<4x1xf32>
    %61 = vector.extract_strided_slice %1 {offsets = [9, 0], sizes = [1, 8], strides = [1, 1]} : vector<12x8xf32> to vector<1x8xf32>
    %62 = vector.broadcast %60 : vector<4x1xf32> to vector<4x8xf32>
    %63 = vector.broadcast %61 : vector<1x8xf32> to vector<4x8xf32>
    %64 = arith.mulf %62, %63 : vector<4x8xf32>
    %65 = arith.addf %59, %64 : vector<4x8xf32>
    %66 = vector.extract_strided_slice %2 {offsets = [0, 10], sizes = [4, 1], strides = [1, 1]} : vector<4x12xf32> to vector<4x1xf32>
    %67 = vector.extract_strided_slice %1 {offsets = [10, 0], sizes = [1, 8], strides = [1, 1]} : vector<12x8xf32> to vector<1x8xf32>
    %68 = vector.broadcast %66 : vector<4x1xf32> to vector<4x8xf32>
    %69 = vector.broadcast %67 : vector<1x8xf32> to vector<4x8xf32>
    %70 = arith.mulf %68, %69 : vector<4x8xf32>
    %71 = arith.addf %65, %70 : vector<4x8xf32>
    %72 = vector.extract_strided_slice %2 {offsets = [0, 11], sizes = [4, 1], strides = [1, 1]} : vector<4x12xf32> to vector<4x1xf32>
    %73 = vector.extract_strided_slice %1 {offsets = [11, 0], sizes = [1, 8], strides = [1, 1]} : vector<12x8xf32> to vector<1x8xf32>
    %74 = vector.broadcast %72 : vector<4x1xf32> to vector<4x8xf32>
    %75 = vector.broadcast %73 : vector<1x8xf32> to vector<4x8xf32>
    %76 = arith.mulf %74, %75 : vector<4x8xf32>
    %77 = arith.addf %71, %76 : vector<4x8xf32>
    %c0_6 = arith.constant 0 : index
    %c0_7 = arith.constant 0 : index
    %c0_8 = arith.constant 0 : index
    %78 = vector.load %arg5[%c0_6, %c0_7, %c0_8] : memref<1x4x8xf32, #tpu.memory_space<vmem>>, vector<1x4x8xf32>
    %79 = vector.shape_cast %78 : vector<1x4x8xf32> to vector<4x8xf32>
    %80 = vector.shape_cast %77 : vector<4x8xf32> to vector<1x4x8xf32>
    tpu.vector_store %arg5[%c0_6, %c0_7, %c0_8], %80 {strides = array<i32>} : memref<1x4x8xf32, #tpu.memory_space<vmem>>, vector<1x4x8xf32>,
    return
  }
  func.func @transform_0(%arg0: i32, %arg1: i32) -> (i32, i32, i32) {
    %c0_i32 = arith.constant 0 : i32
    %c0_i32_0 = arith.constant 0 : i32
    return %arg0, %c0_i32, %arg1 : i32, i32, i32
  }
  func.func @transform_1(%arg0: i32, %arg1: i32) -> (i32, i32) {
    %c0_i32 = arith.constant 0 : i32
    %c0_i32_0 = arith.constant 0 : i32
    %c0_i32_1 = arith.constant 0 : i32
    return %c0_i32, %c0_i32_0 : i32, i32
  }
  func.func @transform_2(%arg0: i32, %arg1: i32) -> (i32, i32) {
    %c0_i32 = arith.constant 0 : i32
    %c0_i32_0 = arith.constant 0 : i32
    %c0_i32_1 = arith.constant 0 : i32
    return %c0_i32, %c0_i32_0 : i32, i32
  }
  func.func @transform_3(%arg0: i32, %arg1: i32) -> (i32, i32, i32) {
    %c0_i32 = arith.constant 0 : i32
    %c0_i32_0 = arith.constant 0 : i32
    return %arg0, %c0_i32, %arg1 : i32, i32, i32
  }
}

</mosaic_0001>

<llo_original>
// kernel: tpu_custom_call.1
$region0: #{tpu_custom_call.1}
  #allocation0 [shape = 'u32[]', space=smem, size = 0x4, offset = 0x4, fixed_abs, tag = 'smem constant byte address 0x4 - core index']
  #allocation1 [shape = 'u32[144,128]{1,0:T(1,128)}', space=vmem, size = 0x12000, scoped, tag = 'internal scratch']
  %s0 = inlined_call_operand.vmem [shape: f32[2,12,8], index: 0, kind: input, shape index: {}]
  %s1 = inlined_call_operand.vmem [shape: f32[4,12], index: 1, kind: input, shape index: {}]
  %s2 = inlined_call_operand.vmem [shape: f32[4,1], index: 2, kind: input, shape index: {}]
  %s3 = inlined_call_operand.hbm [shape: f32[2,4,8], index: 3, kind: output, shape index: {}]
  %s4 = sld [smem:[#allocation0]]
  $region45: #{tpu_custom_call.1} parent=0
    _
  %s6 = ssub.s32 1, %s4
  %s7 = scalar_select 0, %s6, %s4
  $region1: #{tpu_custom_call.1} parent=0
    #allocation2 [shape = 'u8[4096]{0}', space=vmem, size = 0x1000, scoped, tag = 'output window, operand 0']
    #allocation3 [shape = 's32[2]{0}', space=sflag, size = 0x8, scoped, tag = 'scoped memory for tpu_custom_call.1']
    %8 = vsyncpa [#allocation3], 0
    %s9 = scalar_lea.sflag [#allocation3], 1
    %10 = vsyncpa %s9, 0
    loop: start=0, step=1, limit=4
    $region2: #{tpu_custom_call.1} parent=1 // loop_pre_header
      _
    $region3: #{tpu_custom_call.1} parent=1 // loop_header
      %s12 = sphi 0, %s16
      %p13 = scmp.ge.s32.totalorder %s12, 4
      %s19 = sphi 0, %s31
      %s20 = sphi 0, %s27
      %s21 = sphi 0, %s19
      %s22 = sphi 0, %s20
      %s23 = sphi 0, %s21
      %s24 = sphi 0, %s22
      %s36 = sphi 0, %s38
      %s39 = sphi 0, %s36
      %s40 = sphi 0, %s39
      %s56 = sphi 0, %s40
      %s60 = sphi 0, %s60
      %s62 = sphi 0, %s60
      %s63 = sphi 0, %s62
      %s77 = sphi 0, %s63
      %s81 = sphi 0, %s81
      %s83 = sphi 0, %s81
      %s84 = sphi 0, %s83
      %s98 = sphi 0, %s84
      %s106 = sphi 0, %s108
      %s109 = sphi 0, %s106
      %s110 = sphi 0, %s109
      %s126 = sphi 0, %s110
    $region4: #{tpu_custom_call.1} parent=1 // loop_header_branch
      %15 = sbr.rel (%p13) target = $region8
    $region5: #{tpu_custom_call.1} parent=1 // loop_body
      %s17 = ssub.s32 %s12, 1
      %s18 = ssub.s32 %s12, 2
      %s25 = sadd.s32 1, %s20
      %p26 = scmp.ge.s32.totalorder %s25, 1
      %s27 = scalar_select %p26, 0, %s25
      %s28 = sadd.s32 1, %s19
      %s29 = scalar_select %p26, %s28, %s19
      %p30 = scmp.ge.s32.totalorder %s29, 2
      %s31 = scalar_select %p30, 0, %s29
      %s32 = ssub.s32 %s19, %s31
      %s33 = ssub.s32 %s20, %s27
      %s34 = sor.u32 %s32, %s33
      %p35 = scmp.eq.s32.totalorder %s34, 0
      %s37 = sadd.s32 %s36, 1
      %s38 = scalar_select %p35, %s36, %s37
      %p41 = pneg %p35
      %p42 = scmp.eq.s32.totalorder %s12, 1
      %p43 = por %p41, %p42
      %p44 = scmp.ne.s32.totalorder %s36, %s39
      %p45 = scmp.eq.s32.totalorder %s12, 0
      %p46 = por %p44, %p45
      %p47 = scmp.ne.s32.totalorder %s36, %s39
      %p48 = scmp.eq.s32.totalorder %s17, 1
      %p49 = por %p47, %p48
      %p50 = scmp.ne.s32.totalorder %s39, %s40
      %p51 = scmp.eq.s32.totalorder %s17, 0
      %p52 = por %p50, %p51
      %p53 = scmp.ne.s32.totalorder %s39, %s40
      %p54 = scmp.eq.s32.totalorder %s18, 1
      %p55 = por %p53, %p54
      %p57 = scmp.ne.s32.totalorder %s40, %s56
      %p58 = scmp.eq.s32.totalorder %s18, 0
      %p59 = por %p57, %p58
      %s61 = sadd.s32 %s60, 1
      %p64 = scmp.eq.s32.totalorder %s12, 1
      %p65 = scmp.ne.s32.totalorder %s60, %s62
      %p66 = scmp.eq.s32.totalorder %s12, 0
      %p67 = por %p65, %p66
      %p68 = scmp.ne.s32.totalorder %s60, %s62
      %p69 = scmp.eq.s32.totalorder %s17, 1
      %p70 = por %p68, %p69
      %p71 = scmp.ne.s32.totalorder %s62, %s63
      %p72 = scmp.eq.s32.totalorder %s17, 0
      %p73 = por %p71, %p72
      %p74 = scmp.ne.s32.totalorder %s62, %s63
      %p75 = scmp.eq.s32.totalorder %s18, 1
      %p76 = por %p74, %p75
      %p78 = scmp.ne.s32.totalorder %s63, %s77
      %p79 = scmp.eq.s32.totalorder %s18, 0
      %p80 = por %p78, %p79
      %s82 = sadd.s32 %s81, 1
      %p85 = scmp.eq.s32.totalorder %s12, 1
      %p86 = scmp.ne.s32.totalorder %s81, %s83
      %p87 = scmp.eq.s32.totalorder %s12, 0
      %p88 = por %p86, %p87
      %p89 = scmp.ne.s32.totalorder %s81, %s83
      %p90 = scmp.eq.s32.totalorder %s17, 1
      %p91 = por %p89, %p90
      %p92 = scmp.ne.s32.totalorder %s83, %s84
      %p93 = scmp.eq.s32.totalorder %s17, 0
      %p94 = por %p92, %p93
      %p95 = scmp.ne.s32.totalorder %s83, %s84
      %p96 = scmp.eq.s32.totalorder %s18, 1
      %p97 = por %p95, %p96
      %p99 = scmp.ne.s32.totalorder %s84, %s98
      %p100 = scmp.eq.s32.totalorder %s18, 0
      %p101 = por %p99, %p100
      %s102 = ssub.s32 %s19, %s31
      %s103 = ssub.s32 %s20, %s27
      %s104 = sor.u32 %s102, %s103
      %p105 = scmp.eq.s32.totalorder %s104, 0
      %s107 = sadd.s32 %s106, 1
      %s108 = scalar_select %p105, %s106, %s107
      %p111 = pneg %p105
      %p112 = scmp.eq.s32.totalorder %s12, 1
      %p113 = por %p111, %p112
      %p114 = scmp.ne.s32.totalorder %s106, %s109
      %p115 = scmp.eq.s32.totalorder %s12, 0
      %p116 = por %p114, %p115
      %p117 = scmp.ne.s32.totalorder %s106, %s109
      %p118 = scmp.eq.s32.totalorder %s17, 1
      %p119 = por %p117, %p118
      %p120 = scmp.ne.s32.totalorder %s109, %s110
      %p121 = scmp.eq.s32.totalorder %s17, 0
      %p122 = por %p120, %p121
      %p123 = scmp.ne.s32.totalorder %s109, %s110
      %p124 = scmp.eq.s32.totalorder %s18, 1
      %p125 = por %p123, %p124
      %p127 = scmp.ne.s32.totalorder %s110, %s126
      %p128 = scmp.eq.s32.totalorder %s18, 0
      %p129 = por %p127, %p128
      %p130 = scmp.le.s32.totalorder 1, %s12
      %p131 = scmp.lt.s32.totalorder %s12, 3
      %p132 = pnand %p130, %p131
      %p133 = pneg %p132
      // Predicated region
      $region9: #{tpu_custom_call.1} parent=5 // pred_check
        _
      $region10: #{tpu_custom_call.1} parent=5 // pred_check_branch
        %135 = sbr.rel (%p132) target = $region12
      $region11: #{tpu_custom_call.1} parent=5 // pred_region
        %s136 = ssub.s32 %s12, 1
        // Predicated region
        $region13: #{tpu_custom_call.1} parent=11 // pred_check
          %p137 = pneg %p73
        $region14: #{tpu_custom_call.1} parent=11 // pred_check_branch
          %139 = sbr.rel (%p137) target = $region16
        $region15: #{tpu_custom_call.1} parent=11 // pred_region
          _
        $region16: #{tpu_custom_call.1} parent=11 // pred_fallthru
          _
        // Predicated region
        $region17: #{tpu_custom_call.1} parent=11 // pred_check
          %p140 = pneg %p94
        $region18: #{tpu_custom_call.1} parent=11 // pred_check_branch
          %142 = sbr.rel (%p140) target = $region20
        $region19: #{tpu_custom_call.1} parent=11 // pred_region
          _
        $region20: #{tpu_custom_call.1} parent=11 // pred_fallthru
          _
      $region12: #{tpu_custom_call.1} parent=5 // pred_fallthru
        _
      %p143 = scmp.lt.s32.totalorder %s12, 2
      // Predicated region
      $region21: #{tpu_custom_call.1} parent=5 // pred_check
        %p144 = pneg %p143
      $region22: #{tpu_custom_call.1} parent=5 // pred_check_branch
        %146 = sbr.rel (%p144) target = $region24
      $region23: #{tpu_custom_call.1} parent=5 // pred_region
        // Predicated region
        $region25: #{tpu_custom_call.1} parent=23 // pred_check
          %p147 = pneg %p46
        $region26: #{tpu_custom_call.1} parent=23 // pred_check_branch
          %149 = sbr.rel (%p147) target = $region28
        $region27: #{tpu_custom_call.1} parent=23 // pred_region
          %p150 = scmp.lt.s32.totalorder %s19, 1
          %s151 = scalar_select %p150, %s19, 1
          %p152 = scmp.lt.s32.totalorder %s20, 0
          %s153 = scalar_select %p152, %s20, 0
          %s154 = smul.addr %s151, 2
          %s155 = sadd.s32 %s153, %s154
          %s156 = smul.addr %s155, 8
          %s157 = scalar_lea.vmem %s0, %s156
        $region28: #{tpu_custom_call.1} parent=23 // pred_fallthru
          _
      $region24: #{tpu_custom_call.1} parent=5 // pred_fallthru
        _
      %p158 = scmp.le.s32.totalorder 1, %s12
      %p159 = scmp.lt.s32.totalorder %s12, 3
      %p160 = pnand %p158, %p159
      %p161 = pneg %p160
      // Predicated region
      $region29: #{tpu_custom_call.1} parent=5 // pred_check
        _
      $region30: #{tpu_custom_call.1} parent=5 // pred_check_branch
        %163 = sbr.rel (%p160) target = $region32
      $region31: #{tpu_custom_call.1} parent=5 // pred_region
        %s164 = ssub.s32 %s12, 1
        %p165 = scmp.lt.s32.totalorder %s21, 1
        %s166 = scalar_select %p165, %s21, 1
        %p167 = scmp.lt.s32.totalorder %s22, 0
        %s168 = scalar_select %p167, %s22, 0
        %s169 = smul.addr %s166, 2
        %s170 = sadd.s32 %s168, %s169
        %s171 = smul.addr %s170, 8
        %s172 = scalar_lea.vmem %s0, %s171
        %p173 = pneg %p52
        %p174 = pneg %p49
        %p175 = pneg %p73
        %p176 = pneg %p70
        %p177 = pneg %p94
        %p178 = pneg %p91
        %p179 = pneg %p122
        %p180 = pneg %p119
        %s181 = sand.u32 %s109, 1
        %s182 = scalar_lea.sflag [#allocation3], %s181
        %s183 = sand.u32 %s109, 1
        %s184 = smul.addr %s183, 4
        %s185 = scalar_lea.vmem [#allocation2], %s184
        %p186 = scmp.lt.s32.totalorder %s21, 1
        %s187 = scalar_select %p186, %s21, 1
        %p188 = scmp.lt.s32.totalorder %s22, 0
        %s189 = scalar_select %p188, %s22, 0
        %s190 = smul.addr %s187, 2
        %s191 = sadd.s32 %s189, %s190
        %s192 = smul.addr %s191, 8
        %s193 = scalar_lea.vmem %s0, %s192
        %v194 = vld [vmem:[%s193] sm:$0xff]
        %v195 = vld [vmem:[%s193 + $0x8] sm:$0xf]
        %v196 = vld [vmem:[%s1] sm:$0xf]
        %v197 = vld [vmem:[%s2] sm:$0xf]
        %199 = vset.pattern.permute.xlu0 0
        %200 = vperm.xlu0 %199, %v197
        %v201 = vpop.permute.xlu0 %200
        %204 = vset.pattern.permute.xlu0 0
        %205 = vperm.xlu0 %204, %v196
        %v206 = vpop.permute.xlu0 %205
        %v208 = vlaneseq
        %v209 = vshrl.u32 %v208, 7
        %v210 = vsub.s32 0, %v209
        %v211 = vrot.slane %v194, %v210
        %v212 = vmul.f32 %v206, %v211
        %v213 = vadd.f32 %v201, %v212
        %214 = vset.pattern.permute.xlu0 1
        %215 = vperm.xlu0 %214, %v196
        %v216 = vpop.permute.xlu0 %215
        %v218 = vlaneseq
        %v219 = vshrl.u32 %v218, 7
        %v220 = vsub.s32 1, %v219
        %v221 = vrot.slane %v194, %v220
        %v222 = vmul.f32 %v216, %v221
        %v223 = vadd.f32 %v213, %v222
        %224 = vset.pattern.permute.xlu0 2
        %225 = vperm.xlu0 %224, %v196
        %v226 = vpop.permute.xlu0 %225
        %v228 = vlaneseq
        %v229 = vshrl.u32 %v228, 7
        %v230 = vsub.s32 2, %v229
        %v231 = vrot.slane %v194, %v230
        %v232 = vmul.f32 %v226, %v231
        %v233 = vadd.f32 %v223, %v232
        %234 = vset.pattern.permute.xlu0 3
        %235 = vperm.xlu0 %234, %v196
        %v236 = vpop.permute.xlu0 %235
        %v238 = vlaneseq
        %v239 = vshrl.u32 %v238, 7
        %v240 = vsub.s32 3, %v239
        %v241 = vrot.slane %v194, %v240
        %v242 = vmul.f32 %v236, %v241
        %v243 = vadd.f32 %v233, %v242
        %244 = vset.pattern.permute.xlu0 4
        %245 = vperm.xlu0 %244, %v196
        %v246 = vpop.permute.xlu0 %245
        %v248 = vlaneseq
        %v249 = vshrl.u32 %v248, 7
        %v250 = vsub.s32 4, %v249
        %v251 = vrot.slane %v194, %v250
        %v252 = vmul.f32 %v246, %v251
        %v253 = vadd.f32 %v243, %v252
        %254 = vset.pattern.permute.xlu0 5
        %255 = vperm.xlu0 %254, %v196
        %v256 = vpop.permute.xlu0 %255
        %v258 = vlaneseq
        %v259 = vshrl.u32 %v258, 7
        %v260 = vsub.s32 5, %v259
        %v261 = vrot.slane %v194, %v260
        %v262 = vmul.f32 %v256, %v261
        %v263 = vadd.f32 %v253, %v262
        %264 = vset.pattern.permute.xlu0 6
        %265 = vperm.xlu0 %264, %v196
        %v266 = vpop.permute.xlu0 %265
        %v268 = vlaneseq
        %v269 = vshrl.u32 %v268, 7
        %v270 = vsub.s32 6, %v269
        %v271 = vrot.slane %v194, %v270
        %v272 = vmul.f32 %v266, %v271
        %v273 = vadd.f32 %v263, %v272
        %274 = vset.pattern.permute.xlu0 7
        %275 = vperm.xlu0 %274, %v196
        %v276 = vpop.permute.xlu0 %275
        %v278 = vlaneseq
        %v279 = vshrl.u32 %v278, 7
        %v280 = vsub.s32 7, %v279
        %v281 = vrot.slane %v194, %v280
        %v282 = vmul.f32 %v276, %v281
        %v283 = vadd.f32 %v273, %v282
        %284 = vset.pattern.permute.xlu0 8
        %285 = vperm.xlu0 %284, %v196
        %v286 = vpop.permute.xlu0 %285
        %v288 = vlaneseq
        %v289 = vshrl.u32 %v288, 7
        %v290 = vsub.s32 0, %v289
        %v291 = vrot.slane %v195, %v290
        %v292 = vmul.f32 %v286, %v291
        %v293 = vadd.f32 %v283, %v292
        %294 = vset.pattern.permute.xlu0 9
        %295 = vperm.xlu0 %294, %v196
        %v296 = vpop.permute.xlu0 %295
        %v298 = vlaneseq
        %v299 = vshrl.u32 %v298, 7
        %v300 = vsub.s32 1, %v299
        %v301 = vrot.slane %v195, %v300
        %v302 = vmul.f32 %v296, %v301
        %v303 = vadd.f32 %v293, %v302
        %304 = vset.pattern.permute.xlu0 10
        %305 = vperm.xlu0 %304, %v196
        %v306 = vpop.permute.xlu0 %305
        %v308 = vlaneseq
        %v309 = vshrl.u32 %v308, 7
        %v310 = vsub.s32 2, %v309
        %v311 = vrot.slane %v195, %v310
        %v312 = vmul.f32 %v306, %v311
        %v313 = vadd.f32 %v303, %v312
        %314 = vset.pattern.permute.xlu0 11
        %315 = vperm.xlu0 %314, %v196
        %v316 = vpop.permute.xlu0 %315
        %v318 = vlaneseq
        %v319 = vshrl.u32 %v318, 7
        %v320 = vsub.s32 3, %v319
        %v321 = vrot.slane %v195, %v320
        %v322 = vmul.f32 %v316, %v321
        %v323 = vadd.f32 %v313, %v322
        %vm324 = vcmask 60416
        %325 = vst.msk [vmem:[%s185] sm:$0xf] %vm324, %v323
        %s326 = sand.u32 %s109, 1
        %s327 = scalar_lea.sflag [#allocation3], %s326
        %s328 = sand.u32 %s109, 1
        %s329 = smul.addr %s328, 4
        %s330 = scalar_lea.vmem [#allocation2], %s329
        // Predicated region
        $region33: #{tpu_custom_call.1} parent=31 // pred_check
          %p331 = pneg %p119
        $region34: #{tpu_custom_call.1} parent=31 // pred_check_branch
          %333 = sbr.rel (%p331) target = $region36
        $region35: #{tpu_custom_call.1} parent=31 // pred_region
          %s335 = ssub.s32 64, 64
          %336 = vsyncadd %s327, %s335
          %s337 = sadd.s32 %s22, %s21
          %s338 = smul.addr %s337, 64
          %s339 = scalar_lea.hbm %s3, %s338
          %s341 = sshll.u32 %s330, 4
          %s342 = int_to_ptr.vmem [resolvable:$true] %s341
          %344 = dma.vmem_to_hbm [thread:$0]  %s342, 64, %s339, %s327
        $region36: #{tpu_custom_call.1} parent=31 // pred_fallthru
          _
      $region32: #{tpu_custom_call.1} parent=5 // pred_fallthru
        _
      %p345 = scmp.le.s32.totalorder 2, %s12
      // Predicated region
      $region37: #{tpu_custom_call.1} parent=5 // pred_check
        %p346 = pneg %p345
      $region38: #{tpu_custom_call.1} parent=5 // pred_check_branch
        %348 = sbr.rel (%p346) target = $region40
      $region39: #{tpu_custom_call.1} parent=5 // pred_region
        %s349 = ssub.s32 %s12, 2
        // Predicated region
        $region41: #{tpu_custom_call.1} parent=39 // pred_check
          %p350 = pneg %p125
        $region42: #{tpu_custom_call.1} parent=39 // pred_check_branch
          %352 = sbr.rel (%p350) target = $region44
        $region43: #{tpu_custom_call.1} parent=39 // pred_region
          %s353 = sand.u32 %s110, 1
          %s354 = scalar_lea.sflag [#allocation3], %s353
          %s355 = sand.u32 %s110, 1
          %s356 = smul.addr %s355, 4
          %s357 = scalar_lea.vmem [#allocation2], %s356
          %358 = dma.done %s354, 64
        $region44: #{tpu_custom_call.1} parent=39 // pred_fallthru
          _
      $region40: #{tpu_custom_call.1} parent=5 // pred_fallthru
        _
    $region6: #{tpu_custom_call.1} parent=1 // loop_footer
      %s16 = sadd.s32 1, %s12
    $region7: #{tpu_custom_call.1} parent=1 // loop_footer_branch
      %11 = sbr.rel target = $region3
    $region8: #{tpu_custom_call.1} parent=1 // loop_exit
      _
    %359 = vsyncpa [#allocation3], 1
    %s360 = scalar_lea.sflag [#allocation3], 1
    %361 = vsyncpa %s360, 1

</llo_original>
